<compile_context>
chip_gen: v6e
topology: v6e:2x2x1
jax: 0.10.0
libtpu: 0.0.40
codegen_flags: <defaults>
</compile_context>

<pallas_src>
import numpy as np
import jax
import jax.numpy as jnp
from jax.experimental import pallas as pl
from jax.experimental.pallas import tpu as pltpu


# -----------------------------------------------------------------------------
# host helpers
# -----------------------------------------------------------------------------
def _cdiv(a, b):
    return -(-a // b)


def _round_up(a, m):
    return _cdiv(a, m) * m


def _row_tiling(m, target=1024, min_blocks=1):
    """Row block (multiple of 8) and padded row count (multiple of the block)."""
    m8 = _round_up(max(m, 1), 8)
    nblk = max(min_blocks, _cdiv(m8, target))
    blk = _round_up(_cdiv(m8, nblk), 8)
    return blk, blk * nblk


def _pick_sblk(s_pad):
    """Largest s-block (multiple of 128, <=512) that divides s_pad exactly."""
    q = s_pad // 128
    for d in (4, 3, 2, 1):
        if q % d == 0:
            return 128 * d
    return 128


# -----------------------------------------------------------------------------
# Pallas kernels
# -----------------------------------------------------------------------------
def _matmul_kernel(x_ref, w_ref, out_ref):
    # windowed (i)DFT: window already folded into w_ref; lane dim of the output
    # is padded to a multiple of 128 (lane-dense stores).
    out_ref[...] = jnp.dot(x_ref[...], w_ref[...],
                           preferred_element_type=jnp.float32)


def _pvoc_kernel(n0_ref, n1_ref, dphi_ref, alphas_ref, padv_ref, phase0_ref,
                 tri_ref, sre_ref, sim_ref, carry_ref):
    # phase-vocoder elementwise math + blocked cumulative phase + polar().
    # Grid = (B, f-blocks, s-blocks) with the s axis last ("arbitrary"); the
    # exclusive prefix sum over s is blocked: a [s_blk, s_blk] strict-upper-tri
    # matmul inside each block plus a running [fblk, 1] carry in VMEM scratch.
    si = pl.program_id(2)

    @pl.when(si == 0)
    def _():
        carry_ref[...] = jnp.zeros_like(carry_ref)

    two_pi = np.float32(2.0 * np.pi)
    inv_two_pi = np.float32(1.0 / (2.0 * np.pi))
    pa = padv_ref[...]                                   # [fblk, 1]
    ph = dphi_ref[0] - pa                                # dphi = ang1 - ang0
    # round-to-nearest via floor(x+0.5); ties differ from torch.round only at
    # exact .5 which never occurs for float phases.
    ph = ph - two_pi * jnp.floor(ph * inv_two_pi + np.float32(0.5))
    ph = ph + pa
    # exclusive prefix sum within this s-block: ph @ strict_upper_triangular
    local = jnp.dot(ph, tri_ref[...], preferred_element_type=jnp.float32)
    phase_acc = phase0_ref[0] + carry_ref[...] + local
    # carry for the next s-block: total sum of ph inside this block.
    carry_ref[...] += jnp.sum(ph, axis=-1, keepdims=True)
    alphas = alphas_ref[0]                               # [1, s_blk] broadcasts
    n0 = n0_ref[0]
    mag = n0 + alphas * (n1_ref[0] - n0)
    sre_ref[0] = mag * jnp.cos(phase_acc)
    sim_ref[0] = mag * jnp.sin(phase_acc)


def _lerp_clamp_kernel(x0_ref, x1_ref, w0_ref, w1_ref, out_ref):
    # 2-tap linear resample: envelope normalization is folded into w0/w1.
    y = x0_ref[...] * w0_ref[...] + x1_ref[...] * w1_ref[...]
    out_ref[...] = jnp.minimum(jnp.maximum(y, -1.0), 1.0)


# -----------------------------------------------------------------------------
# pallas_call wrappers
# -----------------------------------------------------------------------------
def _rowwise_matmul(x, w, *, target=1024):
    """[M, K] @ [K, N] tiled over rows with a parallel grid (N multiple of 128).

    target=1024 row blocks (mem-bound matmul, bigger tiles -> closer to HBM
    roofline); the grid is forced to >= 2 blocks so both v7x TCs are used.
    """
    M, K = x.shape
    N = w.shape[1]
    blk, m_pad = _row_tiling(M, target=target, min_blocks=2)
    if m_pad != M:
        x = jnp.pad(x, ((0, m_pad - M), (0, 0)))
    out = pl.pallas_call(
        _matmul_kernel,
        out_shape=jax.ShapeDtypeStruct((m_pad, N), jnp.float32),
        grid=(m_pad // blk,),
        in_specs=[pl.BlockSpec((blk, K), lambda i: (i, 0)),
                  pl.BlockSpec((K, N), lambda i: (0, 0))],
        out_specs=pl.BlockSpec((blk, N), lambda i: (i, 0)),
        compiler_params=pltpu.CompilerParams(
            dimension_semantics=("parallel",)),
    )(x, w)
    return out[:M]


def _pvoc_call(n0, n1, dphi, alphas, padv, phase0, tri, fblk, s_blk):
    B, f_pad, s_pad = n0.shape
    nfb = f_pad // fblk
    nsb = s_pad // s_blk
    bfs = pl.BlockSpec((1, fblk, s_blk), lambda b, f, s: (b, f, s))
    in_specs = [bfs, bfs, bfs,
                pl.BlockSpec((1, 1, s_blk), lambda b, f, s: (b, 0, s)),   # alphas
                pl.BlockSpec((fblk, 1), lambda b, f, s: (f, 0)),          # padv
                pl.BlockSpec((1, fblk, 1), lambda b, f, s: (b, f, 0)),    # phase0
                pl.BlockSpec((s_blk, s_blk), lambda b, f, s: (0, 0))]     # tri
    return pl.pallas_call(
        _pvoc_kernel,
        out_shape=(jax.ShapeDtypeStruct((B, f_pad, s_pad), jnp.float32),
                   jax.ShapeDtypeStruct((B, f_pad, s_pad), jnp.float32)),
        grid=(B, nfb, nsb),
        in_specs=in_specs,
        out_specs=(bfs, bfs),
        scratch_shapes=[pltpu.VMEM((fblk, 1), jnp.float32)],
        compiler_params=pltpu.CompilerParams(
            dimension_semantics=("parallel", "parallel", "arbitrary")),
    )(n0, n1, dphi, alphas, padv, phase0, tri)


def _resample_lerp_clamp(x0, x1, w0, w1, B, T):
    """Elementwise lerp + clamp over [B, T] presented as a sublane-dense
    [rows, 128] slab (all 8 sublanes of each vreg used)."""
    t_pad = _round_up(T, 128)
    rows = B * t_pad // 128

    def prep(a):
        a = jnp.asarray(a, jnp.float32)
        if t_pad != T:
            a = jnp.pad(a, ((0, 0), (0, t_pad - T)))
        return a.reshape(rows, 128)

    r_blk, r_pad = _row_tiling(rows, target=1024, min_blocks=1)

    def pad_rows(a):
        return jnp.pad(a, ((0, r_pad - rows), (0, 0))) if r_pad != rows else a

    xs = [pad_rows(prep(a)) for a in (x0, x1, w0, w1)]
    spec = pl.BlockSpec((r_blk, 128), lambda i: (i, 0))
    out = pl.pallas_call(
        _lerp_clamp_kernel,
        out_shape=jax.ShapeDtypeStruct((r_pad, 128), jnp.float32),
        grid=(r_pad // r_blk,),
        in_specs=[spec] * 4,
        out_specs=spec,
        compiler_params=pltpu.CompilerParams(
            dimension_semantics=("parallel",)),
    )(*xs)
    return out[:rows].reshape(B, t_pad)[:, :T]


# -----------------------------------------------------------------------------
# PitchShift.forward port
# -----------------------------------------------------------------------------
def pitch_shift(wav, steps, *, sr=16000, bins_per_octave=12,
                fft=64, hop=16, win=64):
    """JAX/Pallas port of PitchShift.forward.  wav: [B, T] f32, steps: [B] int."""
    wav = jnp.asarray(wav, jnp.float32)
    # TODO(synk): rate-dependent step counts / crop lengths define array shapes
    # in the reference (.item()); they are resolved on host -> one host sync
    # and a recompile per distinct `steps` vector.
    steps_np = np.asarray(jax.device_get(steps))
    B, T = wav.shape
    F = fft // 2 + 1

    # ---- deterministic "parameters": hann window folded into DFT / iDFT -----
    n_idx = np.arange(win)
    window = (0.5 - 0.5 * np.cos(2.0 * np.pi * n_idx / win))
    wpad = np.zeros(fft, np.float64)
    off = (fft - win) // 2
    wpad[off:off + win] = window

    k = np.arange(F)
    ang = 2.0 * np.pi * np.outer(np.arange(fft), k) / fft             # [fft, F]
    n_sp = _round_up(2 * F, 128)                                      # lane pad
    dft_w = np.zeros((fft, n_sp), np.float64)
    dft_w[:, :F] = np.cos(ang) * wpad[:, None]          # analysis window folded
    dft_w[:, F:2 * F] = -np.sin(ang) * wpad[:, None]
    dft_w = dft_w.astype(np.float32)

    w_k = np.full(F, 2.0)
    w_k[0] = 1.0
    if fft % 2 == 0:
        w_k[-1] = 1.0
    ang2 = ang.T                                                       # [F, fft]
    idft_re = w_k[:, None] * np.cos(ang2) / fft
    idft_im = -w_k[:, None] * np.sin(ang2) / fft
    idft_im[0] = 0.0
    if fft % 2 == 0:
        idft_im[-1] = 0.0
    k_sp = n_sp
    n_out = _round_up(fft, 128)
    idft_w = np.zeros((k_sp, n_out), np.float64)
    idft_w[:F, :fft] = idft_re * wpad[None, :]         # synthesis window folded
    idft_w[F:2 * F, :fft] = idft_im * wpad[None, :]
    idft_w = idft_w.astype(np.float32)

    # ---- STFT (center=True, reflect pad) as a row-tiled Pallas matmul --------
    pad = fft // 2
    wav_pad = jnp.pad(wav, ((0, 0), (pad, pad)), mode="reflect")
    n_frames = 1 + T // hop
    # TODO(synk): frames are materialized via an XLA gather (4x duplication at
    # 75% overlap); an in-kernel hop-strided window read (pl.Element offsets)
    # would cut that traffic but is left as XLA glue here.
    frame_idx = np.arange(n_frames)[:, None] * hop + np.arange(fft)[None, :]
    frames2d = wav_pad[:, frame_idx].reshape(B * n_frames, fft)
    spec = _rowwise_matmul(frames2d, jnp.asarray(dft_w))               # [M, n_sp]
    spec = spec.reshape(B, n_frames, n_sp)
    st_re = jnp.transpose(spec[..., :F], (0, 2, 1))                    # [B,F,Tf]
    st_im = jnp.transpose(spec[..., F:2 * F], (0, 2, 1))

    # ---- phase vocoder --------------------------------------------------------
    rate = (np.float32(2.0) ** (-steps_np.astype(np.float32)
                                / np.float32(bins_per_octave))).astype(np.float64)
    step_lists = [np.arange(0.0, float(n_frames), float(r)) for r in rate]
    slen = max(len(s) for s in step_lists)
    steps_grid = np.stack(
        [np.pad(s, (0, slen - len(s)), constant_values=s[-1]) for s in step_lists],
        0)                                                             # [B, slen]
    idx0 = np.floor(steps_grid).astype(np.int32)
    alphas = (steps_grid % 1.0).astype(np.float32)
    phase_adv = np.linspace(0.0, np.pi * hop, F).astype(np.float32)

    s_pad = _round_up(slen, 128)
    s_blk = _pick_sblk(s_pad)
    fblk, f_pad = _row_tiling(F, target=512, min_blocks=1)

    st_re_p = jnp.pad(st_re, ((0, 0), (0, 0), (0, 2)))
    st_im_p = jnp.pad(st_im, ((0, 0), (0, 0), (0, 2)))
    g0 = jnp.broadcast_to(jnp.asarray(idx0)[:, None, :], (B, F, slen))
    # TODO(synk): the data-dependent time gather + transposes + arctan2 stay as
    # XLA glue (fuses with the gather); an in-kernel row gather with SMEM
    # indices ([B, S, F] layout) would remove these HBM round trips entirely.
    re0 = jnp.take_along_axis(st_re_p, g0, axis=-1)
    im0 = jnp.take_along_axis(st_im_p, g0, axis=-1)
    re1 = jnp.take_along_axis(st_re_p, g0 + 1, axis=-1)
    im1 = jnp.take_along_axis(st_im_p, g0 + 1, axis=-1)
    # mag / angle math fused into the gather consumers: only 3 full-size streams
    # (n0, n1, dphi) are written to HBM and read by the pvoc kernel.
    n0 = jnp.sqrt(re0 * re0 + im0 * im0)
    n1 = jnp.sqrt(re1 * re1 + im1 * im1)
    dphi = jnp.arctan2(im1, re1) - jnp.arctan2(im0, re0)
    phase0 = jnp.arctan2(st_im[..., :1], st_re[..., :1])               # [B,F,1]

    pad3 = lambda x: jnp.pad(x, ((0, 0), (0, f_pad - F), (0, s_pad - slen)))
    alphas_j = jnp.pad(jnp.asarray(alphas),
                       ((0, 0), (0, s_pad - slen))).reshape(B, 1, s_pad)
    padv_j = jnp.pad(jnp.asarray(phase_adv), (0, f_pad - F)).reshape(f_pad, 1)
    phase0_j = jnp.pad(phase0, ((0, 0), (0, f_pad - F), (0, 0)))
    # per-block strict upper triangular (exclusive prefix sum within an s-block)
    tri = jnp.asarray(np.triu(np.ones((s_blk, s_blk), np.float32), k=1))
    sre, sim = _pvoc_call(pad3(n0), pad3(n1), pad3(dphi), alphas_j, padv_j,
                          phase0_j, tri, fblk, s_blk)

    # ---- iSTFT: iDFT matmul (Pallas) + overlap-add (reshape trick) ------------
    sre3 = sre[:, :F, :slen]
    sim3 = sim[:, :F, :slen]
    spec_t = jnp.concatenate([jnp.transpose(sre3, (0, 2, 1)),
                              jnp.transpose(sim3, (0, 2, 1))], -1)     # [B,S,2F]
    spec_t = jnp.pad(spec_t, ((0, 0), (0, 0), (0, k_sp - 2 * F)))
    frames_t = _rowwise_matmul(spec_t.reshape(B * slen, k_sp),
                               jnp.asarray(idft_w))
    frames_t = frames_t[:, :fft].reshape(B, slen, fft)

    L_full = (slen - 1) * hop + fft
    # TODO(synk): overlap-add kept as fft/hop XLA scatter-adds (reshape trick);
    # folding it into a Pallas epilogue with a carried accumulator would save a
    # few HBM passes on the iSTFT output path.
    if fft % hop == 0:
        n_ov = fft // hop
        ola = jnp.zeros((B, slen + n_ov - 1, hop), jnp.float32)
        for c in range(n_ov):                       # fft/hop adds, not slen
            ola = ola.at[:, c:c + slen, :].add(
                frames_t[:, :, c * hop:(c + 1) * hop])
        ola = ola.reshape(B, L_full)
    else:                                           # fallback: generic OLA
        ola = jnp.zeros((B, L_full), jnp.float32)
        for f in range(slen):
            ola = ola.at[:, f * hop:f * hop + fft].add(frames_t[:, f, :])

    env = np.zeros(L_full, np.float64)
    w2 = wpad ** 2
    for f in range(slen):
        env[f * hop:f * hop + fft] += w2
    start, L_out = fft // 2, hop * (slen - 1)
    ola_trim = ola[:, start:start + L_out]
    inv_env = 1.0 / env[start:start + L_out]                           # host f64

    # ---- per-batch 2-tap linear resample (align_corners=False) ---------------
    # indices / weights on host; envelope normalization folded into the weights;
    # gather with take_along_axis; lerp + clamp fused into one Pallas kernel.
    t_out = np.arange(T)
    i0 = np.zeros((B, T), np.int32)
    i1 = np.zeros((B, T), np.int32)
    w0 = np.zeros((B, T), np.float32)
    w1 = np.zeros((B, T), np.float32)
    for b in range(B):
        s_b = int(np.float32(T) / np.float32(rate[b]))
        s_b = max(1, min(s_b, L_out))
        scale = s_b / T
        src = np.maximum(scale * (t_out + 0.5) - 0.5, 0.0)
        lo = np.minimum(np.floor(src).astype(np.int64), s_b - 1)
        lam = src - np.floor(src)
        hi = np.minimum(lo + 1, s_b - 1)
        i0[b], i1[b] = lo, hi
        w0[b] = ((1.0 - lam) * inv_env[lo]).astype(np.float32)
        w1[b] = (lam * inv_env[hi]).astype(np.float32)

    x0 = jnp.take_along_axis(ola_trim, jnp.asarray(i0), axis=1)
    x1 = jnp.take_along_axis(ola_trim, jnp.asarray(i1), axis=1)

    return _resample_lerp_clamp(x0, x1, w0, w1, B, T)


if __name__ == "__main__":
    key = jax.random.PRNGKey(0)
    B, T = 2, 512
    wav = jax.random.uniform(key, (B, T), jnp.float32, minval=-0.5, maxval=0.5)
    steps = jnp.array([2, -3], dtype=jnp.int32)
    out = pitch_shift(wav, steps, sr=16000, bins_per_octave=12,
                      fft=64, hop=16, win=64)
    out = jax.block_until_ready(out)
    assert out.shape == (B, T) and out.dtype == jnp.float32
    assert bool(jnp.all(jnp.isfinite(out)))
    print("KERNEL_OK")
</pallas_src>

<mosaic_0001>
module attributes {stable_mosaic.version = 11 : i64} {
  func.func @_matmul_kernel(%arg0: i32, %arg1: memref<40x64xf32, #tpu.memory_space<vmem>>, %arg2: memref<64x128xf32, #tpu.memory_space<vmem>>, %arg3: memref<40x128xf32, #tpu.memory_space<vmem>>) attributes {dimension_semantics = [#tpu.dimension_semantics<parallel>], iteration_bounds = array<i64: 2>, scalar_prefetch = 0 : i64, scratch_operands = 0 : i64, tpu.core_type = #tpu.core_type<tc>, window_params = [{transform_indices = @transform_0, window_bounds = array<i64: 40, 64>}, {pipeline_mode = #tpu.pipeline_mode<synchronous>, transform_indices = @transform_1, window_bounds = array<i64: 64, 128>}, {transform_indices = @transform_2, window_bounds = array<i64: 40, 128>}]} {
    %c0 = arith.constant 0 : index
    %c0_0 = arith.constant 0 : index
    %0 = vector.load %arg1[%c0, %c0_0] : memref<40x64xf32, #tpu.memory_space<vmem>>, vector<40x64xf32>
    %c0_1 = arith.constant 0 : index
    %c0_2 = arith.constant 0 : index
    %1 = vector.load %arg2[%c0_1, %c0_2] : memref<64x128xf32, #tpu.memory_space<vmem>>, vector<64x128xf32>
    %cst = arith.constant dense<0.000000e+00> : vector<40x128xf32>
    %2 = tpu.matmul %0, %1, %cst {dimension_numbers = #tpu.dot_dimension_numbers<[1], [0], [0], [1], [0, 0, 1, 1], [], []>} : vector<40x64xf32>, vector<64x128xf32>, vector<40x128xf32> -> vector<40x128xf32>
    %c0_3 = arith.constant 0 : index
    %c0_4 = arith.constant 0 : index
    %3 = vector.load %arg3[%c0_3, %c0_4] : memref<40x128xf32, #tpu.memory_space<vmem>>, vector<40x128xf32>
    tpu.vector_store %arg3[%c0_3, %c0_4], %2 {strides = array<i32>} : memref<40x128xf32, #tpu.memory_space<vmem>>, vector<40x128xf32>,
    return
  }
  func.func @transform_0(%arg0: i32) -> (i32, i32) {
    %c0_i32 = arith.constant 0 : i32
    %c0_i32_0 = arith.constant 0 : i32
    return %arg0, %c0_i32 : i32, i32
  }
  func.func @transform_1(%arg0: i32) -> (i32, i32) {
    %c0_i32 = arith.constant 0 : i32
    %c0_i32_0 = arith.constant 0 : i32
    %c0_i32_1 = arith.constant 0 : i32
    return %c0_i32, %c0_i32_0 : i32, i32
  }
  func.func @transform_2(%arg0: i32) -> (i32, i32) {
    %c0_i32 = arith.constant 0 : i32
    %c0_i32_0 = arith.constant 0 : i32
    return %arg0, %c0_i32 : i32, i32
  }
}

</mosaic_0001>

<llo_original>
// kernel: tpu_custom_call.1
$region0: #{tpu_custom_call.1}
  #allocation0 [shape = 'u32[]', space=smem, size = 0x4, offset = 0x4, fixed_abs, tag = 'smem constant byte address 0x4 - core index']
  #allocation1 [shape = 'u32[144,128]{1,0:T(1,128)}', space=vmem, size = 0x12000, scoped, tag = 'internal scratch']
  %s0 = inlined_call_operand.vmem [shape: f32[80,64], index: 0, kind: input, shape index: {}]
  %s1 = inlined_call_operand.vmem [shape: f32[64,128], index: 1, kind: input, shape index: {}]
  %s2 = inlined_call_operand.hbm [shape: f32[80,128], index: 2, kind: output, shape index: {}]
  %s3 = sld [smem:[#allocation0]]
  $region41: #{tpu_custom_call.1} parent=0
    _
  %s5 = ssub.s32 1, %s3
  %s6 = scalar_select 0, %s5, %s3
  $region1: #{tpu_custom_call.1} parent=0
    #allocation2 [shape = 'u8[40960]{0}', space=vmem, size = 0xa000, scoped, tag = 'output window, operand 0']
    #allocation3 [shape = 's32[2]{0}', space=sflag, size = 0x8, scoped, tag = 'scoped memory for tpu_custom_call.1']
    %7 = vsyncpa [#allocation3], 0
    %s8 = scalar_lea.sflag [#allocation3], 1
    %9 = vsyncpa %s8, 0
    loop: start=0, step=1, limit=4
    $region2: #{tpu_custom_call.1} parent=1 // loop_pre_header
      _
    $region3: #{tpu_custom_call.1} parent=1 // loop_header
      %s11 = sphi 0, %s15
      %p12 = scmp.ge.s32.totalorder %s11, 4
      %s21 = sphi 0, %s23
      %s24 = sphi 0, %s21
      %s25 = sphi 0, %s24
      %s41 = sphi 0, %s25
      %s45 = sphi 0, %s45
      %s47 = sphi 0, %s45
      %s48 = sphi 0, %s47
      %s62 = sphi 0, %s48
      %s68 = sphi 0, %s70
      %s71 = sphi 0, %s68
      %s72 = sphi 0, %s71
      %s88 = sphi 0, %s72
    $region4: #{tpu_custom_call.1} parent=1 // loop_header_branch
      %14 = sbr.rel (%p12) target = $region8
    $region5: #{tpu_custom_call.1} parent=1 // loop_body
      %s16 = ssub.s32 %s11, 1
      %s17 = ssub.s32 %s11, 2
      %s18 = sadd.s32 %s11, 1
      %s19 = ssub.s32 %s11, %s18
      %p20 = scmp.eq.s32.totalorder %s19, 0
      %s22 = sadd.s32 %s21, 1
      %s23 = scalar_select %p20, %s21, %s22
      %p26 = pneg %p20
      %p27 = scmp.eq.s32.totalorder %s11, 1
      %p28 = por %p26, %p27
      %p29 = scmp.ne.s32.totalorder %s21, %s24
      %p30 = scmp.eq.s32.totalorder %s11, 0
      %p31 = por %p29, %p30
      %p32 = scmp.ne.s32.totalorder %s21, %s24
      %p33 = scmp.eq.s32.totalorder %s16, 1
      %p34 = por %p32, %p33
      %p35 = scmp.ne.s32.totalorder %s24, %s25
      %p36 = scmp.eq.s32.totalorder %s16, 0
      %p37 = por %p35, %p36
      %p38 = scmp.ne.s32.totalorder %s24, %s25
      %p39 = scmp.eq.s32.totalorder %s17, 1
      %p40 = por %p38, %p39
      %p42 = scmp.ne.s32.totalorder %s25, %s41
      %p43 = scmp.eq.s32.totalorder %s17, 0
      %p44 = por %p42, %p43
      %s46 = sadd.s32 %s45, 1
      %p49 = scmp.eq.s32.totalorder %s11, 1
      %p50 = scmp.ne.s32.totalorder %s45, %s47
      %p51 = scmp.eq.s32.totalorder %s11, 0
      %p52 = por %p50, %p51
      %p53 = scmp.ne.s32.totalorder %s45, %s47
      %p54 = scmp.eq.s32.totalorder %s16, 1
      %p55 = por %p53, %p54
      %p56 = scmp.ne.s32.totalorder %s47, %s48
      %p57 = scmp.eq.s32.totalorder %s16, 0
      %p58 = por %p56, %p57
      %p59 = scmp.ne.s32.totalorder %s47, %s48
      %p60 = scmp.eq.s32.totalorder %s17, 1
      %p61 = por %p59, %p60
      %p63 = scmp.ne.s32.totalorder %s48, %s62
      %p64 = scmp.eq.s32.totalorder %s17, 0
      %p65 = por %p63, %p64
      %s66 = ssub.s32 %s11, %s18
      %p67 = scmp.eq.s32.totalorder %s66, 0
      %s69 = sadd.s32 %s68, 1
      %s70 = scalar_select %p67, %s68, %s69
      %p73 = pneg %p67
      %p74 = scmp.eq.s32.totalorder %s11, 1
      %p75 = por %p73, %p74
      %p76 = scmp.ne.s32.totalorder %s68, %s71
      %p77 = scmp.eq.s32.totalorder %s11, 0
      %p78 = por %p76, %p77
      %p79 = scmp.ne.s32.totalorder %s68, %s71
      %p80 = scmp.eq.s32.totalorder %s16, 1
      %p81 = por %p79, %p80
      %p82 = scmp.ne.s32.totalorder %s71, %s72
      %p83 = scmp.eq.s32.totalorder %s16, 0
      %p84 = por %p82, %p83
      %p85 = scmp.ne.s32.totalorder %s71, %s72
      %p86 = scmp.eq.s32.totalorder %s17, 1
      %p87 = por %p85, %p86
      %p89 = scmp.ne.s32.totalorder %s72, %s88
      %p90 = scmp.eq.s32.totalorder %s17, 0
      %p91 = por %p89, %p90
      %p92 = scmp.le.s32.totalorder 1, %s11
      %p93 = scmp.lt.s32.totalorder %s11, 3
      %p94 = pnand %p92, %p93
      %p95 = pneg %p94
      // Predicated region
      $region9: #{tpu_custom_call.1} parent=5 // pred_check
        _
      $region10: #{tpu_custom_call.1} parent=5 // pred_check_branch
        %97 = sbr.rel (%p94) target = $region12
      $region11: #{tpu_custom_call.1} parent=5 // pred_region
        %s98 = ssub.s32 %s11, 1
        // Predicated region
        $region13: #{tpu_custom_call.1} parent=11 // pred_check
          %p99 = pneg %p58
        $region14: #{tpu_custom_call.1} parent=11 // pred_check_branch
          %101 = sbr.rel (%p99) target = $region16
        $region15: #{tpu_custom_call.1} parent=11 // pred_region
          _
        $region16: #{tpu_custom_call.1} parent=11 // pred_fallthru
          _
      $region12: #{tpu_custom_call.1} parent=5 // pred_fallthru
        _
      %p102 = scmp.lt.s32.totalorder %s11, 2
      // Predicated region
      $region17: #{tpu_custom_call.1} parent=5 // pred_check
        %p103 = pneg %p102
      $region18: #{tpu_custom_call.1} parent=5 // pred_check_branch
        %105 = sbr.rel (%p103) target = $region20
      $region19: #{tpu_custom_call.1} parent=5 // pred_region
        // Predicated region
        $region21: #{tpu_custom_call.1} parent=19 // pred_check
          %p106 = pneg %p31
        $region22: #{tpu_custom_call.1} parent=19 // pred_check_branch
          %108 = sbr.rel (%p106) target = $region24
        $region23: #{tpu_custom_call.1} parent=19 // pred_region
          %s109 = smul.u32 5, %s11
          %p110 = scmp.lt.s32.totalorder %s109, 9
          %s111 = scalar_select %p110, %s109, 9
          %s112 = smul.addr %s111, 8
          %s113 = scalar_lea.vmem %s0, %s112
          %s114 = smul.u32 5, %s11
        $region24: #{tpu_custom_call.1} parent=19 // pred_fallthru
          _
      $region20: #{tpu_custom_call.1} parent=5 // pred_fallthru
        _
      %p115 = scmp.le.s32.totalorder 1, %s11
      %p116 = scmp.lt.s32.totalorder %s11, 3
      %p117 = pnand %p115, %p116
      %p118 = pneg %p117
      // Predicated region
      $region25: #{tpu_custom_call.1} parent=5 // pred_check
        _
      $region26: #{tpu_custom_call.1} parent=5 // pred_check_branch
        %120 = sbr.rel (%p117) target = $region28
      $region27: #{tpu_custom_call.1} parent=5 // pred_region
        %s121 = ssub.s32 %s11, 1
        %s122 = smul.u32 5, %s16
        %p123 = scmp.lt.s32.totalorder %s122, 9
        %s124 = scalar_select %p123, %s122, 9
        %s125 = smul.addr %s124, 8
        %s126 = scalar_lea.vmem %s0, %s125
        %p127 = pneg %p37
        %p128 = pneg %p34
        %p129 = pneg %p58
        %p130 = pneg %p55
        %p131 = pneg %p84
        %p132 = pneg %p81
        %s133 = sand.u32 %s71, 1
        %s134 = scalar_lea.sflag [#allocation3], %s133
        %s135 = sand.u32 %s71, 1
        %s136 = smul.addr %s135, 40
        %s137 = scalar_lea.vmem [#allocation2], %s136
        %s138 = smul.u32 5, %s16
        %p139 = scmp.lt.s32.totalorder %s138, 9
        %s140 = scalar_select %p139, %s138, 9
        %s141 = smul.addr %s140, 8
        %s142 = scalar_lea.vmem %s0, %s141
        %s143 = smul.u32 5, %s16
        %s144 = smul.u32 5, %s16
        %v145 = vld [vmem:[%s142] sm:$0xff]
        %v146 = vld [vmem:[%s142 + $0x8] sm:$0xff]
        %v147 = vld [vmem:[%s142 + $0x10] sm:$0xff]
        %v148 = vld [vmem:[%s142 + $0x18] sm:$0xff]
        %v149 = vld [vmem:[%s142 + $0x20] sm:$0xff]
        %v150 = vld [vmem:[%s1] sm:$0xff]
        %v151 = vld [vmem:[%s1 + $0x8] sm:$0xff]
        %v152 = vld [vmem:[%s1 + $0x10] sm:$0xff]
        %v153 = vld [vmem:[%s1 + $0x18] sm:$0xff]
        %v154 = vld [vmem:[%s1 + $0x20] sm:$0xff]
        %v155 = vld [vmem:[%s1 + $0x28] sm:$0xff]
        %v156 = vld [vmem:[%s1 + $0x30] sm:$0xff]
        %v157 = vld [vmem:[%s1 + $0x38] sm:$0xff]
        %vm158 = vcmask 523264
        %v160 = vsel %vm158, %v145, 0
        %v163 = vsel %vm158, %v146, 0
        %v166 = vsel %vm158, %v147, 0
        %v169 = vsel %vm158, %v148, 0
        %v172 = vsel %vm158, %v149, 0
        %174 = vmatprep.subr.mxu0 0.0
        %175 = vmatpush1.msra.mxu0 0.0
        %176 = vmatprep.subr.mxu0 0.0
        %177 = vmatpush1.msra.mxu0 0.0
        %178 = vmatprep.subr.mxu0 0.0
        %179 = vmatpush1.msra.mxu0 0.0
        %180 = vmatprep.subr.mxu0 0.0
        %181 = vmatpush1.msra.mxu0 0.0
        %182 = vmatprep.subr.mxu0 0.0
        %183 = vmatpush1.msra.mxu0 0.0
        %184 = vmatprep.subr.mxu0 0.0
        %185 = vmatpush1.msra.mxu0 0.0
        %186 = vmatprep.subr.mxu0 0.0
        %187 = vmatpush1.msra.mxu0 0.0
        %188 = vmatprep.subr.mxu0 0.0
        %189 = vmatpush1.msra.mxu0 0.0
        %190 = vmatprep.subr.mxu0 0.0
        %191 = vmatpush1.msra.mxu0 %v157
        %192 = vmatprep.subr.mxu0 0.0
        %193 = vmatpush1.msra.mxu0 %v156
        %194 = vmatprep.subr.mxu0 0.0
        %195 = vmatpush1.msra.mxu0 %v155
        %196 = vmatprep.subr.mxu0 0.0
        %197 = vmatpush1.msra.mxu0 %v154
        %198 = vmatprep.subr.mxu0 0.0
        %199 = vmatpush1.msra.mxu0 %v153
        %200 = vmatprep.subr.mxu0 0.0
        %201 = vmatpush1.msra.mxu0 %v152
        %202 = vmatprep.subr.mxu0 0.0
        %203 = vmatpush1.msra.mxu0 %v151
        %204 = vmatprep.subr.mxu0 0.0
        %205 = vmatpush1.msra.mxu0 %v150
        %206 = vmatprep.subr.mxu0 0.0
        %207 = vmatpush2.msra.mxu0 0.0
        %208 = vmatprep.subr.mxu0 0.0
        %209 = vmatpush2.msra.mxu0 0.0
        %210 = vmatprep.subr.mxu0 0.0
        %211 = vmatpush2.msra.mxu0 0.0
        %212 = vmatprep.subr.mxu0 0.0
        %213 = vmatpush2.msra.mxu0 0.0
        %214 = vmatprep.subr.mxu0 0.0
        %215 = vmatpush2.msra.mxu0 0.0
        %216 = vmatprep.subr.mxu0 0.0
        %217 = vmatpush2.msra.mxu0 0.0
        %218 = vmatprep.subr.mxu0 0.0
        %219 = vmatpush2.msra.mxu0 0.0
        %220 = vmatprep.subr.mxu0 0.0
        %221 = vmatpush2.msra.mxu0 0.0
        %222 = vmatprep.subr.mxu0 0.0
        %223 = vmatpush2.msra.mxu0 0.0
        %224 = vmatprep.subr.mxu0 0.0
        %225 = vmatpush2.msra.mxu0 0.0
        %226 = vmatprep.subr.mxu0 0.0
        %227 = vmatpush2.msra.mxu0 0.0
        %228 = vmatprep.subr.mxu0 0.0
        %229 = vmatpush2.msra.mxu0 0.0
        %230 = vmatprep.subr.mxu0 0.0
        %231 = vmatpush2.msra.mxu0 0.0
        %232 = vmatprep.subr.mxu0 0.0
        %233 = vmatpush2.msra.mxu0 0.0
        %234 = vmatprep.subr.mxu0 0.0
        %235 = vmatpush2.msra.mxu0 0.0
        %236 = vmatprep.subr.mxu0 0.0
        %237 = vmatpush2.msra.mxu0 0.0
        %238 = vmatprep.mubr.f32.mxu0 0.0
        %239 = vmatmul.mubr.f32.gmra.mxu0 %v160
        %v240 = vpop.f32.mrf.mxu0
        %v241 = vadd.f32 0.0, %v240
        %v242 = vpop.f32.mrf.mxu0
        %243 = vmatprep.mubr.f32.mxu0 0.0
        %244 = vmatmul.mubr.f32.gmra.mxu0 %v163
        %v245 = vpop.f32.mrf.mxu0
        %v246 = vadd.f32 0.0, %v245
        %v247 = vpop.f32.mrf.mxu0
        %248 = vmatprep.mubr.f32.mxu0 0.0
        %249 = vmatmul.mubr.f32.gmra.mxu0 %v166
        %v250 = vpop.f32.mrf.mxu0
        %v251 = vadd.f32 0.0, %v250
        %v252 = vpop.f32.mrf.mxu0
        %253 = vmatprep.mubr.f32.mxu0 0.0
        %254 = vmatmul.mubr.f32.gmra.mxu0 %v169
        %v255 = vpop.f32.mrf.mxu0
        %v256 = vadd.f32 0.0, %v255
        %v257 = vpop.f32.mrf.mxu0
        %258 = vmatprep.mubr.f32.mxu0 0.0
        %259 = vmatmul.mubr.f32.gmra.mxu0 %v172
        %v260 = vpop.f32.mrf.mxu0
        %v261 = vadd.f32 0.0, %v260
        %v262 = vpop.f32.mrf.mxu0
        %263 = vdwg.mxu0
        %264 = vst [vmem:[%s137] sm:$0xff] %v241
        %265 = vst [vmem:[%s137 + $0x8] sm:$0xff] %v246
        %266 = vst [vmem:[%s137 + $0x10] sm:$0xff] %v251
        %267 = vst [vmem:[%s137 + $0x18] sm:$0xff] %v256
        %268 = vst [vmem:[%s137 + $0x20] sm:$0xff] %v261
        %s269 = sand.u32 %s71, 1
        %s270 = scalar_lea.sflag [#allocation3], %s269
        %s271 = sand.u32 %s71, 1
        %s272 = smul.addr %s271, 40
        %s273 = scalar_lea.vmem [#allocation2], %s272
        // Predicated region
        $region29: #{tpu_custom_call.1} parent=27 // pred_check
          %p274 = pneg %p81
        $region30: #{tpu_custom_call.1} parent=27 // pred_check_branch
          %276 = sbr.rel (%p274) target = $region32
        $region31: #{tpu_custom_call.1} parent=27 // pred_region
          %s277 = smul.u32 5, %s16
          %s279 = ssub.s32 640, 640
          %280 = vsyncadd %s270, %s279
          %s281 = smul.addr %s277, 128
          %s282 = scalar_lea.hbm %s2, %s281
          %s283 = sshll.u32 %s273, 4
          %s284 = int_to_ptr.vmem [resolvable:$true] %s283
          %289 = dma.vmem_to_hbm [thread:$0]  %s284, 640, %s282, %s270, 128, 128, 8
        $region32: #{tpu_custom_call.1} parent=27 // pred_fallthru
          _
      $region28: #{tpu_custom_call.1} parent=5 // pred_fallthru
        _
      %p290 = scmp.le.s32.totalorder 2, %s11
      // Predicated region
      $region33: #{tpu_custom_call.1} parent=5 // pred_check
        %p291 = pneg %p290
      $region34: #{tpu_custom_call.1} parent=5 // pred_check_branch
        %293 = sbr.rel (%p291) target = $region36
      $region35: #{tpu_custom_call.1} parent=5 // pred_region
        %s294 = ssub.s32 %s11, 2
        // Predicated region
        $region37: #{tpu_custom_call.1} parent=35 // pred_check
          %p295 = pneg %p87
        $region38: #{tpu_custom_call.1} parent=35 // pred_check_branch
          %297 = sbr.rel (%p295) target = $region40
        $region39: #{tpu_custom_call.1} parent=35 // pred_region
          %s298 = sand.u32 %s72, 1
          %s299 = scalar_lea.sflag [#allocation3], %s298
          %s300 = sand.u32 %s72, 1
          %s301 = smul.addr %s300, 40
          %s302 = scalar_lea.vmem [#allocation2], %s301
          %303 = dma.done %s299, 640
        $region40: #{tpu_custom_call.1} parent=35 // pred_fallthru
          _
      $region36: #{tpu_custom_call.1} parent=5 // pred_fallthru
        _
    $region6: #{tpu_custom_call.1} parent=1 // loop_footer
      %s15 = sadd.s32 1, %s11
    $region7: #{tpu_custom_call.1} parent=1 // loop_footer_branch
      %10 = sbr.rel target = $region3
    $region8: #{tpu_custom_call.1} parent=1 // loop_exit
      _
    %304 = vsyncpa [#allocation3], 1
    %s305 = scalar_lea.sflag [#allocation3], 1
    %306 = vsyncpa %s305, 1

</llo_original>
